<compile_context>
chip_gen: v7x
topology: tpu7x:2x2x1
jax: 0.10.0
libtpu: 0.0.40
codegen_flags: <defaults>
</compile_context>

<pallas_src>
import functools

import jax
import jax.numpy as jnp
from jax.experimental import pallas as pl
from jax.experimental.pallas import tpu as pltpu

_LANE = 128
_NEG_SLOPE = 0.01  # PyTorch nn.LeakyReLU default negative_slope


def _round_up(x, m):
    return (x + m - 1) // m * m


def _resident_spec(shape):
    """BlockSpec for a grid-invariant operand (stays VMEM-resident)."""
    index_map = lambda i: (0, 0)
    try:
        # Grid-invariant inputs do not need double buffering.
        return pl.BlockSpec(shape, index_map, pipeline_mode=pl.Buffered(1))
    except TypeError:  # older BlockSpec without pipeline_mode kwarg
        return pl.BlockSpec(shape, index_map)


def _mlp_fwd_kernel(x_ref, w1_ref, b1_ref, w2_ref, b2_ref, o_ref, *, out_size):
    # Dropout layers are identity at inference time.
    # dense1: Linear(in_size -> fil_num). Cast x to the MXU dtype at the
    # matmul boundary; accumulate in f32.
    x = x_ref[...].astype(w1_ref.dtype)
    h = jnp.dot(x, w1_ref[...], preferred_element_type=jnp.float32)
    h = h + b1_ref[...]                              # f32 bias add (VPU)
    # dense2: LeakyReLU (f32, VPU) -> Linear(fil_num -> out_size).
    a = jnp.where(h > 0, h, _NEG_SLOPE * h)
    o = jnp.dot(a.astype(w2_ref.dtype), w2_ref[...],
                preferred_element_type=jnp.float32)
    o = o + b2_ref[...]
    # Store only the real output columns; padded MXU lanes never reach HBM.
    o_ref[...] = o[:, :out_size].astype(o_ref.dtype)


def _mlp_dense1_kernel(x_ref, w1_ref, b1_ref, h_ref, *, fil_num):
    # get_intermediate_score path: dense1 only (pre-activation), no 2nd matmul.
    x = x_ref[...].astype(w1_ref.dtype)
    h = jnp.dot(x, w1_ref[...], preferred_element_type=jnp.float32)
    h = h + b1_ref[...]
    h_ref[...] = h[:, :fil_num].astype(h_ref.dtype)


def prepare_mlp_params(w1_pt, b1, w2_pt, b2, compute_dtype=jnp.bfloat16):
    """One-time (model-init) parameter prep: transpose PyTorch (out,in) weights
    to (in,out), zero-pad the hidden/output lane axes to multiples of 128 for
    the MXU (weights only — activations are never padded per call), cast the
    weights to the MXU compute dtype, keep biases in f32."""
    fil_num, in_size = w1_pt.shape
    out_size = w2_pt.shape[0]

    F = _round_up(fil_num, _LANE)
    N = _round_up(out_size, _LANE)

    w1 = jnp.zeros((in_size, F), compute_dtype).at[:, :fil_num].set(
        jnp.transpose(w1_pt).astype(compute_dtype))
    w2 = jnp.zeros((F, N), compute_dtype).at[:fil_num, :out_size].set(
        jnp.transpose(w2_pt).astype(compute_dtype))
    b1r = jnp.zeros((1, F), jnp.float32).at[0, :fil_num].set(b1.astype(jnp.float32))
    b2r = jnp.zeros((1, N), jnp.float32).at[0, :out_size].set(b2.astype(jnp.float32))

    return {
        "w1": w1, "b1": b1r, "w2": w2, "b2": b2r,
        "in_size": in_size, "fil_num": fil_num, "out_size": out_size,
        "compute_dtype": compute_dtype,
    }


def mlp_forward(x, params, get_intermediate_score=False, block_m=512):
    """x: (B, in_size) -> (B, out_size)  (or (B, fil_num) if intermediate)."""
    B, in_size = x.shape
    assert in_size == params["in_size"]
    compute_dtype = params["compute_dtype"]
    w1, b1, w2, b2 = params["w1"], params["b1"], params["w2"], params["b2"]
    fil_num, out_size = params["fil_num"], params["out_size"]
    F = w1.shape[1]
    N = w2.shape[1]

    # Batch tiling: large tiles amortize the ~0.35us/step grid overhead.
    # Sublane multiple is 16 for bf16 tiles, 8 for f32.
    sub = 16 if (compute_dtype == jnp.bfloat16 or x.dtype == jnp.bfloat16) else 8
    B_sub = _round_up(B, sub)
    TM = max(sub, min(_round_up(block_m, sub), B_sub))
    # Keep >= 2 batch tiles when the batch allows it so that
    # dimension_semantics=("parallel",) can shard across v7x's 2 TensorCores.
    if B_sub >= 2 * sub:
        TM = min(TM, _round_up((B_sub + 1) // 2, sub))
    B_pad = _round_up(B, TM)
    grid_m = B_pad // TM

    # Only the batch axis is ever padded (and only when B % TM != 0).
    x_in = x if B_pad == B else jnp.pad(x, ((0, B_pad - B), (0, 0)))

    x_spec = pl.BlockSpec((TM, in_size), lambda i: (i, 0))
    isz_x = jnp.dtype(x.dtype).itemsize
    isz_w = jnp.dtype(compute_dtype).itemsize

    if get_intermediate_score:
        kernel = functools.partial(_mlp_dense1_kernel, fil_num=fil_num)
        in_specs = [x_spec, _resident_spec((in_size, F)), _resident_spec((1, F))]
        operands = (x_in, w1, b1)
        out_shape = jax.ShapeDtypeStruct((B_pad, fil_num), jnp.float32)
        out_spec = pl.BlockSpec((TM, fil_num), lambda i: (i, 0))
        flops = 2 * B_pad * in_size * F
        bytes_accessed = (B_pad * in_size * isz_x + in_size * F * isz_w
                          + F * 4 + B_pad * fil_num * 4)
    else:
        kernel = functools.partial(_mlp_fwd_kernel, out_size=out_size)
        in_specs = [x_spec,
                    _resident_spec((in_size, F)), _resident_spec((1, F)),
                    _resident_spec((F, N)), _resident_spec((1, N))]
        operands = (x_in, w1, b1, w2, b2)
        out_shape = jax.ShapeDtypeStruct((B_pad, out_size), jnp.float32)
        out_spec = pl.BlockSpec((TM, out_size), lambda i: (i, 0))
        flops = 2 * B_pad * (in_size * F + F * N)
        bytes_accessed = (B_pad * in_size * isz_x
                          + (in_size * F + F * N) * isz_w
                          + (F + N) * 4
                          + B_pad * out_size * 4)

    out = pl.pallas_call(
        kernel,
        out_shape=out_shape,
        grid=(grid_m,),
        in_specs=in_specs,
        out_specs=out_spec,
        compiler_params=pltpu.CompilerParams(
            dimension_semantics=("parallel",),   # batch tiles across TCs (v7x)
            vmem_limit_bytes=32 * 1024 * 1024,   # fits every generation; usage is tiny
        ),
        cost_estimate=pl.CostEstimate(flops=flops, transcendentals=0,
                                      bytes_accessed=bytes_accessed),
    )(*operands)

    return out if B_pad == B else out[:B]


if __name__ == "__main__":
    # Shapes consistent with the module:
    #   in_size=32, config = {fil_num: 64, drop_rate: 0.5, out_size: 8}, batch=8
    B, in_size, fil_num, out_size = 8, 32, 64, 8

    key = jax.random.PRNGKey(0)
    kx, kw1, kb1, kw2, kb2, kx2 = jax.random.split(key, 6)

    x = jax.random.normal(kx, (B, in_size), dtype=jnp.float32)

    # Deterministic parameter init (PyTorch-Linear-style uniform bounds).
    bound1 = 1.0 / (in_size ** 0.5)
    w1_pt = jax.random.uniform(kw1, (fil_num, in_size), jnp.float32, -bound1, bound1)
    b1 = jax.random.uniform(kb1, (fil_num,), jnp.float32, -bound1, bound1)
    bound2 = 1.0 / (fil_num ** 0.5)
    w2_pt = jax.random.uniform(kw2, (out_size, fil_num), jnp.float32, -bound2, bound2)
    b2 = jax.random.uniform(kb2, (out_size,), jnp.float32, -bound2, bound2)

    # Pure-JAX reference (eval-mode: Dropout = identity).
    def ref_fwd(xv):
        h = xv @ w1_pt.T + b1
        a = jnp.where(h > 0, h, _NEG_SLOPE * h)
        return a @ w2_pt.T + b2, h

    o_ref, h_ref = ref_fwd(x)

    # --- f32 path (exact check) ---
    params_f32 = prepare_mlp_params(w1_pt, b1, w2_pt, b2, compute_dtype=jnp.float32)
    out = mlp_forward(x, params_f32)
    jax.block_until_ready(out)
    assert out.shape == (B, out_size)
    assert jnp.allclose(out, o_ref, atol=1e-5, rtol=1e-5)

    # get_intermediate_score path (dense1-only specialized kernel).
    h_int = mlp_forward(x, params_f32, get_intermediate_score=True)
    jax.block_until_ready(h_int)
    assert h_int.shape == (B, fil_num)
    assert jnp.allclose(h_int, h_ref, atol=1e-5, rtol=1e-5)

    # --- default bf16 MXU path (f32 accumulation / f32 VPU stage) ---
    params_bf16 = prepare_mlp_params(w1_pt, b1, w2_pt, b2)
    out_bf16 = mlp_forward(x, params_bf16)
    jax.block_until_ready(out_bf16)
    assert out_bf16.shape == (B, out_size)
    assert jnp.allclose(out_bf16, o_ref, atol=5e-2, rtol=5e-2)

    # --- larger ragged batch: multi-tile grid + batch-only padding path ---
    B2 = 300
    x2 = jax.random.normal(kx2, (B2, in_size), dtype=jnp.float32)
    o2_ref, _ = ref_fwd(x2)
    out2 = mlp_forward(x2, params_f32, block_m=128)
    jax.block_until_ready(out2)
    assert out2.shape == (B2, out_size)
    assert jnp.allclose(out2, o2_ref, atol=1e-5, rtol=1e-5)

    print("KERNEL_OK")
</pallas_src>

<mosaic_0001>
module attributes {stable_mosaic.version = 11 : i64} {
  func.func @_mlp_fwd_kernel(%arg0: i32, %arg1: memref<8x32xf32, #tpu.memory_space<vmem>>, %arg2: memref<32x128xf32, #tpu.memory_space<vmem>>, %arg3: memref<1x128xf32, #tpu.memory_space<vmem>>, %arg4: memref<128x128xf32, #tpu.memory_space<vmem>>, %arg5: memref<1x128xf32, #tpu.memory_space<vmem>>, %arg6: memref<8x8xf32, #tpu.memory_space<vmem>>) attributes {dimension_semantics = [#tpu.dimension_semantics<parallel>], iteration_bounds = array<i64: 1>, scalar_prefetch = 0 : i64, scratch_operands = 0 : i64, tpu.core_type = #tpu.core_type<tc>, window_params = [{transform_indices = @transform_0, window_bounds = array<i64: 8, 32>}, {pipeline_mode = #tpu.pipeline_mode<synchronous>, transform_indices = @transform_1, window_bounds = array<i64: 32, 128>}, {pipeline_mode = #tpu.pipeline_mode<synchronous>, transform_indices = @transform_2, window_bounds = array<i64: 1, 128>}, {pipeline_mode = #tpu.pipeline_mode<synchronous>, transform_indices = @transform_3, window_bounds = array<i64: 128, 128>}, {pipeline_mode = #tpu.pipeline_mode<synchronous>, transform_indices = @transform_4, window_bounds = array<i64: 1, 128>}, {transform_indices = @transform_5, window_bounds = array<i64: 8, 8>}]} {
    %c0 = arith.constant 0 : index
    %c0_0 = arith.constant 0 : index
    %0 = vector.load %arg1[%c0, %c0_0] : memref<8x32xf32, #tpu.memory_space<vmem>>, vector<8x32xf32>
    %c0_1 = arith.constant 0 : index
    %c0_2 = arith.constant 0 : index
    %1 = vector.load %arg2[%c0_1, %c0_2] : memref<32x128xf32, #tpu.memory_space<vmem>>, vector<32x128xf32>
    %cst = arith.constant dense<0.000000e+00> : vector<8x128xf32>
    %2 = tpu.matmul %0, %1, %cst {dimension_numbers = #tpu.dot_dimension_numbers<[1], [0], [0], [1], [0, 0, 1, 1], [], []>} : vector<8x32xf32>, vector<32x128xf32>, vector<8x128xf32> -> vector<8x128xf32>
    %c0_3 = arith.constant 0 : index
    %c0_4 = arith.constant 0 : index
    %3 = vector.load %arg3[%c0_3, %c0_4] : memref<1x128xf32, #tpu.memory_space<vmem>>, vector<1x128xf32>
    %4 = vector.broadcast %3 : vector<1x128xf32> to vector<8x128xf32>
    %5 = arith.addf %2, %4 : vector<8x128xf32>
    %cst_5 = arith.constant 0.000000e+00 : f32
    %6 = vector.broadcast %cst_5 : f32 to vector<8x128xf32>
    %7 = arith.cmpf ogt, %5, %6 : vector<8x128xf32>
    %cst_6 = arith.constant 0.00999999977 : f32
    %8 = vector.broadcast %cst_6 : f32 to vector<8x128xf32>
    %9 = arith.mulf %8, %5 : vector<8x128xf32>
    %10 = arith.select %7, %5, %9 : vector<8x128xi1>, vector<8x128xf32>
    %c0_7 = arith.constant 0 : index
    %c0_8 = arith.constant 0 : index
    %11 = vector.load %arg4[%c0_7, %c0_8] : memref<128x128xf32, #tpu.memory_space<vmem>>, vector<128x128xf32>
    %cst_9 = arith.constant dense<0.000000e+00> : vector<8x128xf32>
    %12 = tpu.matmul %10, %11, %cst_9 {dimension_numbers = #tpu.dot_dimension_numbers<[1], [0], [0], [1], [0, 0, 1, 1], [], []>} : vector<8x128xf32>, vector<128x128xf32>, vector<8x128xf32> -> vector<8x128xf32>
    %c0_10 = arith.constant 0 : index
    %c0_11 = arith.constant 0 : index
    %13 = vector.load %arg5[%c0_10, %c0_11] : memref<1x128xf32, #tpu.memory_space<vmem>>, vector<1x128xf32>
    %14 = vector.broadcast %13 : vector<1x128xf32> to vector<8x128xf32>
    %15 = arith.addf %12, %14 : vector<8x128xf32>
    %16 = vector.extract_strided_slice %15 {offsets = [0, 0], sizes = [8, 8], strides = [1, 1]} : vector<8x128xf32> to vector<8x8xf32>
    %c0_12 = arith.constant 0 : index
    %c0_13 = arith.constant 0 : index
    %17 = vector.load %arg6[%c0_12, %c0_13] : memref<8x8xf32, #tpu.memory_space<vmem>>, vector<8x8xf32>
    tpu.vector_store %arg6[%c0_12, %c0_13], %16 {strides = array<i32>} : memref<8x8xf32, #tpu.memory_space<vmem>>, vector<8x8xf32>,
    return
  }
  func.func @transform_0(%arg0: i32) -> (i32, i32) {
    %c0_i32 = arith.constant 0 : i32
    %c0_i32_0 = arith.constant 0 : i32
    return %arg0, %c0_i32 : i32, i32
  }
  func.func @transform_1(%arg0: i32) -> (i32, i32) {
    %c0_i32 = arith.constant 0 : i32
    %c0_i32_0 = arith.constant 0 : i32
    %c0_i32_1 = arith.constant 0 : i32
    return %c0_i32, %c0_i32_0 : i32, i32
  }
  func.func @transform_2(%arg0: i32) -> (i32, i32) {
    %c0_i32 = arith.constant 0 : i32
    %c0_i32_0 = arith.constant 0 : i32
    %c0_i32_1 = arith.constant 0 : i32
    return %c0_i32, %c0_i32_0 : i32, i32
  }
  func.func @transform_3(%arg0: i32) -> (i32, i32) {
    %c0_i32 = arith.constant 0 : i32
    %c0_i32_0 = arith.constant 0 : i32
    %c0_i32_1 = arith.constant 0 : i32
    return %c0_i32, %c0_i32_0 : i32, i32
  }
  func.func @transform_4(%arg0: i32) -> (i32, i32) {
    %c0_i32 = arith.constant 0 : i32
    %c0_i32_0 = arith.constant 0 : i32
    %c0_i32_1 = arith.constant 0 : i32
    return %c0_i32, %c0_i32_0 : i32, i32
  }
  func.func @transform_5(%arg0: i32) -> (i32, i32) {
    %c0_i32 = arith.constant 0 : i32
    %c0_i32_0 = arith.constant 0 : i32
    return %arg0, %c0_i32 : i32, i32
  }
}

</mosaic_0001>

<llo_original>
// kernel: tpu_custom_call.1
$region0: #{tpu_custom_call.1}
  #allocation0 [shape = 'u32[]', space=smem, size = 0x4, offset = 0x4, fixed_abs, tag = 'smem constant byte address 0x4 - core index']
  #allocation1 [shape = 'u32[144,128]{1,0:T(1,128)}', space=vmem, size = 0x12000, scoped, tag = 'internal scratch']
  %s0 = inlined_call_operand.hbm [shape: f32[8,32], index: 0, kind: input, shape index: {}]
  %s1 = inlined_call_operand.hbm [shape: f32[32,128], index: 1, kind: input, shape index: {}]
  %s2 = inlined_call_operand.vmem [shape: f32[1,128], index: 2, kind: input, shape index: {}]
  %s3 = inlined_call_operand.hbm [shape: f32[128,128], index: 3, kind: input, shape index: {}]
  %s4 = inlined_call_operand.vmem [shape: f32[1,128], index: 4, kind: input, shape index: {}]
  %s5 = inlined_call_operand.hbm [shape: f32[8,8], index: 5, kind: output, shape index: {}]
  %s6 = sld [smem:[#allocation0]]
  $region42: #{tpu_custom_call.1} parent=0
    _
  %s8 = ssub.s32 1, %s6
  %s9 = scalar_select 0, %s8, %s6
  $region1: #{tpu_custom_call.1} parent=0
    #allocation2 [shape = 'u8[4096]{0}', space=vmem, size = 0x1000, scoped, tag = 'input window, operand 0, single buffered']
    #allocation3 [shape = 's32[1]{0}', space=sflag, size = 0x4, scoped, tag = 'scoped memory for tpu_custom_call.1']
    #allocation4 [shape = 's32[1]{0}', space=sflag, size = 0x4, scoped, tag = 'scoped memory for tpu_custom_call.1']
    #allocation5 [shape = 'u8[16384]{0}', space=vmem, size = 0x4000, scoped, tag = 'input window, operand 1, single buffered']
    #allocation6 [shape = 's32[1]{0}', space=sflag, size = 0x4, scoped, tag = 'scoped memory for tpu_custom_call.1']
    #allocation7 [shape = 'u8[65536]{0}', space=vmem, size = 0x10000, scoped, tag = 'input window, operand 3, single buffered']
    #allocation8 [shape = 'u8[4096]{0}', space=vmem, size = 0x1000, scoped, tag = 'output window, operand 0, single buffered']
    %10 = vsyncpa [#allocation3], 0
    %11 = vsyncpa [#allocation6], 0
    %12 = vsyncpa [#allocation4], 0
    // Predicated region
    $region2: #{tpu_custom_call.1} parent=1 // pred_check
      _
    $region3: #{tpu_custom_call.1} parent=1 // pred_check_branch
      %14 = sbr.rel (0) target = $region5
    $region4: #{tpu_custom_call.1} parent=1 // pred_region
      %s16 = ssub.s32 128, 128
      %17 = vsyncadd [#allocation3], %s16
      %s19 = sshll.u32 [#allocation2], 4
      %s20 = int_to_ptr.vmem [resolvable:$true] %s19
      %22 = dma.hbm_to_vmem [thread:$0]  %s0, 128, %s20, [#allocation3]
    $region5: #{tpu_custom_call.1} parent=1 // pred_fallthru
      _
    // Predicated region
    $region6: #{tpu_custom_call.1} parent=1 // pred_check
      _
    $region7: #{tpu_custom_call.1} parent=1 // pred_check_branch
      %24 = sbr.rel (0) target = $region9
    $region8: #{tpu_custom_call.1} parent=1 // pred_region
      %s26 = ssub.s32 512, 512
      %27 = vsyncadd [#allocation6], %s26
      %s28 = sshll.u32 [#allocation5], 4
      %s29 = int_to_ptr.vmem [resolvable:$true] %s28
      %34 = dma.hbm_to_vmem [thread:$0]  %s1, 512, %s29, [#allocation6], 128, 128, 8
    $region9: #{tpu_custom_call.1} parent=1 // pred_fallthru
      _
    // Predicated region
    $region10: #{tpu_custom_call.1} parent=1 // pred_check
      _
    $region11: #{tpu_custom_call.1} parent=1 // pred_check_branch
      %36 = sbr.rel (0) target = $region13
    $region12: #{tpu_custom_call.1} parent=1 // pred_region
      _
    $region13: #{tpu_custom_call.1} parent=1 // pred_fallthru
      _
    // Predicated region
    $region14: #{tpu_custom_call.1} parent=1 // pred_check
      _
    $region15: #{tpu_custom_call.1} parent=1 // pred_check_branch
      %38 = sbr.rel (0) target = $region17
    $region16: #{tpu_custom_call.1} parent=1 // pred_region
      %s40 = ssub.s32 2048, 2048
      %41 = vsyncadd [#allocation6], %s40
      %s42 = sshll.u32 [#allocation7], 4
      %s43 = int_to_ptr.vmem [resolvable:$true] %s42
      %48 = dma.hbm_to_vmem [thread:$0]  %s3, 2048, %s43, [#allocation6], 128, 128, 8
    $region17: #{tpu_custom_call.1} parent=1 // pred_fallthru
      _
    // Predicated region
    $region18: #{tpu_custom_call.1} parent=1 // pred_check
      _
    $region19: #{tpu_custom_call.1} parent=1 // pred_check_branch
      %50 = sbr.rel (0) target = $region21
    $region20: #{tpu_custom_call.1} parent=1 // pred_region
      _
    $region21: #{tpu_custom_call.1} parent=1 // pred_fallthru
      _
    // Predicated region
    $region22: #{tpu_custom_call.1} parent=1 // pred_check
      _
    $region23: #{tpu_custom_call.1} parent=1 // pred_check_branch
      %52 = sbr.rel (0) target = $region25
    $region24: #{tpu_custom_call.1} parent=1 // pred_region
      %53 = dma.done [#allocation3], 128
    $region25: #{tpu_custom_call.1} parent=1 // pred_fallthru
      _
    // Predicated region
    $region26: #{tpu_custom_call.1} parent=1 // pred_check
      _
    $region27: #{tpu_custom_call.1} parent=1 // pred_check_branch
      %55 = sbr.rel (0) target = $region29
    $region28: #{tpu_custom_call.1} parent=1 // pred_region
      %56 = dma.done [#allocation6], 512
    $region29: #{tpu_custom_call.1} parent=1 // pred_fallthru
      _
    // Predicated region
    $region30: #{tpu_custom_call.1} parent=1 // pred_check
      _
    $region31: #{tpu_custom_call.1} parent=1 // pred_check_branch
      %58 = sbr.rel (0) target = $region33
    $region32: #{tpu_custom_call.1} parent=1 // pred_region
      %59 = dma.done [#allocation6], 2048
    $region33: #{tpu_custom_call.1} parent=1 // pred_fallthru
      _
    %v60 = vld [vmem:[#allocation2] sm:$0xff]
    %v61 = vld [vmem:[#allocation5] sm:$0xff]
    %v62 = vld [vmem:[#allocation5 + $0x8] sm:$0xff]
    %v63 = vld [vmem:[#allocation5 + $0x10] sm:$0xff]
    %v64 = vld [vmem:[#allocation5 + $0x18] sm:$0xff]
    %v65 = vld [vmem:[%s2] sm:$0x1]
    %v67 = vlaneseq
    %v68 = vshrl.u32 %v67, 7
    %v69 = vsub.s32 0, %v68
    %v70 = vrot.slane %v65, %v69
    %vm72 = vcmask 261120
    %v74 = vsel %vm72, %v60, 0
    %76 = vmatprep.subr.mxu0 0.0
    %77 = vmatpush1.msra.mxu0 %v61
    %78 = vmatprep.subr.mxu0 0.0
    %79 = vmatpush1.msra.mxu0 %v62
    %80 = vmatprep.subr.mxu0 0.0
    %81 = vmatpush1.msra.mxu0 %v63
    %82 = vmatprep.subr.mxu0 0.0
    %83 = vmatpush1.msra.mxu0 %v64
    %84 = vmatprep.subr.mxu0 0.0
    %85 = vmatpush1.msra.mxu0 0.0
    %86 = vmatprep.subr.mxu0 0.0
    %87 = vmatpush1.msra.mxu0 0.0
    %88 = vmatprep.subr.mxu0 0.0
    %89 = vmatpush1.msra.mxu0 0.0
    %90 = vmatprep.subr.mxu0 0.0
    %91 = vmatpush1.msra.mxu0 0.0
    %92 = vmatprep.subr.mxu0 0.0
    %93 = vmatpush1.msra.mxu0 0.0
    %94 = vmatprep.subr.mxu0 0.0
    %95 = vmatpush1.msra.mxu0 0.0
    %96 = vmatprep.subr.mxu0 0.0
    %97 = vmatpush1.msra.mxu0 0.0
    %98 = vmatprep.subr.mxu0 0.0
    %99 = vmatpush1.msra.mxu0 0.0
    %100 = vmatprep.subr.mxu0 0.0
    %101 = vmatpush1.msra.mxu0 0.0
    %102 = vmatprep.subr.mxu0 0.0
    %103 = vmatpush1.msra.mxu0 0.0
    %104 = vmatprep.subr.mxu0 0.0
    %105 = vmatpush1.msra.mxu0 0.0
    %106 = vmatprep.subr.mxu0 0.0
    %107 = vmatpush1.msra.mxu0 0.0
    %108 = vmatprep.subr.mxu0 0.0
    %109 = vmatpush1.msra.mxu0 0.0
    %110 = vmatprep.subr.mxu0 0.0
    %111 = vmatpush1.msra.mxu0 0.0
    %112 = vmatprep.subr.mxu0 0.0
    %113 = vmatpush1.msra.mxu0 0.0
    %114 = vmatprep.subr.mxu0 0.0
    %115 = vmatpush1.msra.mxu0 0.0
    %116 = vmatprep.subr.mxu0 0.0
    %117 = vmatpush1.msra.mxu0 0.0
    %118 = vmatprep.subr.mxu0 0.0
    %119 = vmatpush1.msra.mxu0 0.0
    %120 = vmatprep.subr.mxu0 0.0
    %121 = vmatpush1.msra.mxu0 0.0
    %122 = vmatprep.subr.mxu0 0.0
    %123 = vmatpush1.msra.mxu0 0.0
    %124 = vmatprep.subr.mxu0 0.0
    %125 = vmatpush1.msra.mxu0 0.0
    %126 = vmatprep.subr.mxu0 0.0
    %127 = vmatpush1.msra.mxu0 0.0
    %128 = vmatprep.subr.mxu0 0.0
    %129 = vmatpush1.msra.mxu0 0.0
    %130 = vmatprep.subr.mxu0 0.0
    %131 = vmatpush1.msra.mxu0 0.0
    %132 = vmatprep.subr.mxu0 0.0
    %133 = vmatpush1.msra.mxu0 0.0
    %134 = vmatprep.subr.mxu0 0.0
    %135 = vmatpush1.msra.mxu0 0.0
    %136 = vmatprep.subr.mxu0 0.0
    %137 = vmatpush1.msra.mxu0 0.0
    %138 = vmatprep.subr.mxu0 0.0
    %139 = vmatpush1.msra.mxu0 0.0
    %140 = vmatprep.mubr.f32.mxu0 0.0
    %141 = vmatmul.mubr.f32.gmra.mrb[0].mxu0 %v74
    %v142 = vpop.f32.mrb[0].mxu0
    %v143 = vadd.f32 %v70, %v142
    %v144 = vpop.f32.mrb[0].mxu0
    %145 = vdwg.mxu0
    %vm146 = vcmp.gt.f32.partialorder %v143, 0.0
    %v147 = vmul.f32 %v143, 0.01
    %v148 = vsel %vm146, %v143, %v147
    %v149 = vld [vmem:[#allocation7] sm:$0xff]
    %v150 = vld [vmem:[#allocation7 + $0x8] sm:$0xff]
    %v151 = vld [vmem:[#allocation7 + $0x10] sm:$0xff]
    %v152 = vld [vmem:[#allocation7 + $0x18] sm:$0xff]
    %v153 = vld [vmem:[#allocation7 + $0x20] sm:$0xff]
    %v154 = vld [vmem:[#allocation7 + $0x28] sm:$0xff]
    %v155 = vld [vmem:[#allocation7 + $0x30] sm:$0xff]
    %v156 = vld [vmem:[#allocation7 + $0x38] sm:$0xff]
    %v157 = vld [vmem:[#allocation7 + $0x40] sm:$0xff]
    %v158 = vld [vmem:[#allocation7 + $0x48] sm:$0xff]
    %v159 = vld [vmem:[#allocation7 + $0x50] sm:$0xff]
    %v160 = vld [vmem:[#allocation7 + $0x58] sm:$0xff]
    %v161 = vld [vmem:[#allocation7 + $0x60] sm:$0xff]
    %v162 = vld [vmem:[#allocation7 + $0x68] sm:$0xff]
    %v163 = vld [vmem:[#allocation7 + $0x70] sm:$0xff]
    %v164 = vld [vmem:[#allocation7 + $0x78] sm:$0xff]
    %v165 = vld [vmem:[%s4] sm:$0x1]
    %v167 = vlaneseq
    %v168 = vshrl.u32 %v167, 7
    %v169 = vsub.s32 0, %v168
    %v170 = vrot.slane %v165, %v169
    %172 = vmatprep.subr.mxu0 0.0
    %173 = vmatpush1.msra.mxu0 %v149
    %174 = vmatprep.subr.mxu0 0.0
    %175 = vmatpush1.msra.mxu0 %v150
    %176 = vmatprep.subr.mxu0 0.0
    %177 = vmatpush1.msra.mxu0 %v151
    %178 = vmatprep.subr.mxu0 0.0
    %179 = vmatpush1.msra.mxu0 %v152
    %180 = vmatprep.subr.mxu0 0.0
    %181 = vmatpush1.msra.mxu0 %v153
    %182 = vmatprep.subr.mxu0 0.0
    %183 = vmatpush1.msra.mxu0 %v154
    %184 = vmatprep.subr.mxu0 0.0
    %185 = vmatpush1.msra.mxu0 %v155
    %186 = vmatprep.subr.mxu0 0.0
    %187 = vmatpush1.msra.mxu0 %v156
    %188 = vmatprep.subr.mxu0 0.0
    %189 = vmatpush1.msra.mxu0 %v157
    %190 = vmatprep.subr.mxu0 0.0
    %191 = vmatpush1.msra.mxu0 %v158
    %192 = vmatprep.subr.mxu0 0.0
    %193 = vmatpush1.msra.mxu0 %v159
    %194 = vmatprep.subr.mxu0 0.0
    %195 = vmatpush1.msra.mxu0 %v160
    %196 = vmatprep.subr.mxu0 0.0
    %197 = vmatpush1.msra.mxu0 %v161
    %198 = vmatprep.subr.mxu0 0.0
    %199 = vmatpush1.msra.mxu0 %v162
    %200 = vmatprep.subr.mxu0 0.0
    %201 = vmatpush1.msra.mxu0 %v163
    %202 = vmatprep.subr.mxu0 0.0
    %203 = vmatpush1.msra.mxu0 %v164
    %204 = vmatprep.subr.mxu0 0.0
    %205 = vmatpush1.msra.mxu0 0.0
    %206 = vmatprep.subr.mxu0 0.0
    %207 = vmatpush1.msra.mxu0 0.0
    %208 = vmatprep.subr.mxu0 0.0
    %209 = vmatpush1.msra.mxu0 0.0
    %210 = vmatprep.subr.mxu0 0.0
    %211 = vmatpush1.msra.mxu0 0.0
    %212 = vmatprep.subr.mxu0 0.0
    %213 = vmatpush1.msra.mxu0 0.0
    %214 = vmatprep.subr.mxu0 0.0
    %215 = vmatpush1.msra.mxu0 0.0
    %216 = vmatprep.subr.mxu0 0.0
    %217 = vmatpush1.msra.mxu0 0.0
    %218 = vmatprep.subr.mxu0 0.0
    %219 = vmatpush1.msra.mxu0 0.0
    %220 = vmatprep.subr.mxu0 0.0
    %221 = vmatpush1.msra.mxu0 0.0
    %222 = vmatprep.subr.mxu0 0.0
    %223 = vmatpush1.msra.mxu0 0.0
    %224 = vmatprep.subr.mxu0 0.0
    %225 = vmatpush1.msra.mxu0 0.0
    %226 = vmatprep.subr.mxu0 0.0
    %227 = vmatpush1.msra.mxu0 0.0
    %228 = vmatprep.subr.mxu0 0.0
    %229 = vmatpush1.msra.mxu0 0.0
    %230 = vmatprep.subr.mxu0 0.0
    %231 = vmatpush1.msra.mxu0 0.0
    %232 = vmatprep.subr.mxu0 0.0
    %233 = vmatpush1.msra.mxu0 0.0
    %234 = vmatprep.subr.mxu0 0.0
    %235 = vmatpush1.msra.mxu0 0.0
    %236 = vmatprep.mubr.f32.mxu0 0.0
    %237 = vmatmul.mubr.f32.gmra.mrb[0].mxu0 %v148
    %v238 = vpop.f32.mrb[0].mxu0
    %v239 = vadd.f32 %v170, %v238
    %v240 = vpop.f32.mrb[0].mxu0
    %241 = vdwg.mxu0
    %vm242 = vcmask 64512
    %243 = vst.msk [vmem:[#allocation8] sm:$0xff] %vm242, %v239
    // Predicated region
    $region34: #{tpu_custom_call.1} parent=1 // pred_check
      _
    $region35: #{tpu_custom_call.1} parent=1 // pred_check_branch
      %245 = sbr.rel (0) target = $region37
    $region36: #{tpu_custom_call.1} parent=1 // pred_region
      %s247 = ssub.s32 128, 128
      %248 = vsyncadd [#allocation4], %s247
      %s250 = sshll.u32 [#allocation8], 4
      %s251 = int_to_ptr.vmem [resolvable:$true] %s250
      %253 = dma.vmem_to_hbm [thread:$0]  %s251, 128, %s5, [#allocation4]
    $region37: #{tpu_custom_call.1} parent=1 // pred_fallthru
      _
    // Predicated region
    $region38: #{tpu_custom_call.1} parent=1 // pred_check
      _
    $region39: #{tpu_custom_call.1} parent=1 // pred_check_branch
      %255 = sbr.rel (0) target = $region41
    $region40: #{tpu_custom_call.1} parent=1 // pred_region
      %256 = dma.done [#allocation4], 128
    $region41: #{tpu_custom_call.1} parent=1 // pred_fallthru
      _
    %257 = vsyncpa [#allocation3], 1
    %258 = vsyncpa [#allocation6], 1
    %259 = vsyncpa [#allocation4], 1

</llo_original>
